<compile_context>
chip_gen: v6e
topology: v6e:2x2x1
jax: 0.10.0
libtpu: 0.0.40
codegen_flags: <defaults>
</compile_context>

<pallas_src>
import functools

import jax
import jax.numpy as jnp
from jax.experimental import pallas as pl
from jax.experimental.pallas import tpu as pltpu


def _round_up(n, m):
    return ((n + m - 1) // m) * m


def _round_down(n, m):
    return (n // m) * m


# Replicate W1 into the packed buffer only while the flattened contraction
# K = S*D stays modest; beyond this the wrapper pre-pools over S instead.
_FLATTEN_MAX_K = 4096


def _make_layout(K, H1, H2):
    """Row/col layout of the packed parameter buffer (static Python ints).

    rows [0, K)        : W1 section (cols [0, H1))  -- tiled W1/S (or plain W1)
    row  K             : b1                         (cols [0, H1))
    rows [r_w2, +C)    : W2 (first H1 rows x first H2 cols)
    row  r_b2          : b2                         (cols [0, H2))
    row  r_w3          : w3 row                     (cols [0, H2))
    row  r_b3          : b3 at col 0
    All padding is zero, which stays inert through the matmuls / ReLUs / reduce.
    """
    C = max(H1, H2)
    r_w2 = _round_up(K + 1, 8)
    r_b2 = r_w2 + C
    r_w3 = _round_up(r_b2 + 1, 8)
    r_b3 = r_w3 + 1
    R = _round_up(r_b3 + 1, 8)           # == r_w3 + 8, so the 8-row w3 slice is in-bounds
    return (K, H1, H2, C, r_w2, r_b2, r_w3, r_b3, R)


def _pack_params(params, tile, scale, layout, dtype):
    """Pack (W1,b1,W2,b2,w3,b3) into one zero-padded (R, C) buffer of `dtype`.

    The W1 section holds `tile` stacked copies of (W1 * scale); with the
    flattened (B, S*D) input and scale = 1/S this folds the mean-pool into the
    first matmul.
    """
    K, H1, H2, C, r_w2, r_b2, r_w3, r_b3, R = layout
    w1, b1, w2, b2, w3, b3 = params
    buf = jnp.zeros((R, C), jnp.float32)
    buf = buf.at[0:K, 0:H1].set(jnp.tile(w1.astype(jnp.float32) * scale, (tile, 1)))
    buf = buf.at[K, 0:H1].set(b1.astype(jnp.float32))
    buf = buf.at[r_w2:r_w2 + H1, 0:H2].set(w2.astype(jnp.float32))
    buf = buf.at[r_b2, 0:H2].set(b2.astype(jnp.float32))
    buf = buf.at[r_w3, 0:H2].set(jnp.reshape(w3, (-1,)).astype(jnp.float32))
    buf = buf.at[r_b3, 0].set(jnp.reshape(b3, ()).astype(jnp.float32))
    return buf.astype(dtype)


def _make_kernel(spec):
    K, H1, H2, C, r_w2, r_b2, r_w3, r_b3, R, TB = spec

    def kernel(x_ref, p_ref, out_ref):
        # x_ref: (TB, K) rows in their native dtype (f32 or bf16).
        # p_ref: (R, C) packed params in the same dtype (zero padding is inert).
        # out_ref: (1, TB) lane-major values.
        # First layer: K = S*D, mean-pool folded into the tiled W1/S section.
        h1 = jnp.dot(x_ref[...], p_ref[0:K, :],
                     preferred_element_type=jnp.float32)                 # (TB, C)
        h1 = jnp.maximum(h1 + p_ref[K:K + 1, :].astype(jnp.float32), 0.0)
        h2 = jnp.dot(h1, p_ref[r_w2:r_w2 + C, :].astype(jnp.float32),
                     preferred_element_type=jnp.float32)                 # (TB, C)
        h2 = jnp.maximum(h2 + p_ref[r_b2:r_b2 + 1, :].astype(jnp.float32), 0.0)
        # Final Linear(H2 -> 1): (8, C) x (TB, C)^T MXU pass so the result lands
        # lane-major; rows 1..7 of the w3 slice are zero padding / b3 and are
        # discarded (only row 0 is w3).
        w3_rows = p_ref[r_w3:r_w3 + 8, :].astype(jnp.float32)
        v = jax.lax.dot_general(w3_rows, h2,
                                dimension_numbers=(((1,), (1,)), ((), ())),
                                preferred_element_type=jnp.float32)      # (8, TB)
        v = v[0:1, :] + p_ref[r_b3:r_b3 + 1, 0:1].astype(jnp.float32)    # (1, TB)
        out_ref[...] = v.astype(out_ref.dtype)

    return kernel


def _choose_tiling(B, K, itemsize, resident_bytes):
    """Pick (TB, padded batch).

    * VMEM-aware: the double-buffered (TB, K) input block plus the resident
      packed params stays well under the smallest scoped-VMEM default
      (v5e: 16 MiB) and far under v7x's smaller physical VMEM.
    * Keeps >= 2 grid steps for larger batches so both v7x TensorCores get work
      (dimension_semantics=("parallel",) shards grid steps across cores).
    * When tiled, TB is a multiple of 128 so the lane-major (1, TB) output block
      satisfies the (8, 128) block constraint; padded batch rows are inert and
      sliced off in the wrapper.
    """
    budget = 12 << 20
    avail = max(budget - 2 * resident_bytes, 2 << 20)
    tb_cap = max(8, avail // (2 * K * itemsize))        # double-buffered x block
    b8 = _round_up(B, 8)
    if b8 <= 256 and b8 <= tb_cap:
        return b8, b8                                   # single full block
    half = max(128, _round_down(max(B // 2, 128), 128))
    tb = max(128, min(512, _round_down(tb_cap, 128), half))
    return tb, _round_up(B, tb)


def _critic_value_pallas(spec, x2d, pbuf):
    K, H1, H2, C, r_w2, r_b2, r_w3, r_b3, R, TB = spec
    Bp = x2d.shape[0]
    grid = Bp // TB
    x_isz = jnp.dtype(x2d.dtype).itemsize
    p_bytes = R * C * jnp.dtype(pbuf.dtype).itemsize
    vmem_need = (2 * TB * K * x_isz          # double-buffered input block
                 + 2 * p_bytes               # packed params (double-buffered)
                 + 2 * TB * x_isz            # output block
                 + (4 << 20))                # scratch / spill headroom
    vmem_limit = int(min(max(vmem_need, 8 << 20), 32 << 20))
    cost = pl.CostEstimate(
        flops=2 * Bp * (K * H1 + H1 * H2 + H2),
        transcendentals=0,
        bytes_accessed=Bp * K * x_isz + p_bytes + Bp * x_isz)
    out = pl.pallas_call(
        _make_kernel(spec),
        out_shape=jax.ShapeDtypeStruct((1, Bp), x2d.dtype),
        grid=(grid,),
        in_specs=[
            pl.BlockSpec((TB, K), lambda i: (i, 0)),
            pl.BlockSpec((R, C), lambda i: (0, 0)),
        ],
        out_specs=pl.BlockSpec((1, TB), lambda i: (0, i)),
        compiler_params=pltpu.CompilerParams(
            dimension_semantics=("parallel",),
            vmem_limit_bytes=vmem_limit),
        cost_estimate=cost,
    )(x2d, pbuf)
    return out[0, :]                          # (Bp,)


def _critic_value_ref(spec, x2d, pbuf):
    """Pure-JAX mirror of the kernel math (used only for the backward pass)."""
    K, H1, H2, C, r_w2, r_b2, r_w3, r_b3, R, TB = spec
    pf = pbuf.astype(jnp.float32)
    h1 = jnp.dot(x2d, pbuf[0:K, :], preferred_element_type=jnp.float32) + pf[K]
    h1 = jnp.maximum(h1, 0.0)
    h2 = jnp.maximum(h1 @ pf[r_w2:r_w2 + C, :] + pf[r_b2], 0.0)
    v = jnp.sum(h2 * pf[r_w3], axis=-1) + pf[r_b3, 0]
    return v.astype(x2d.dtype)


@functools.partial(jax.custom_vjp, nondiff_argnums=(0,))
def _critic_value(spec, x2d, pbuf):
    return _critic_value_pallas(spec, x2d, pbuf)


def _critic_value_fwd(spec, x2d, pbuf):
    return _critic_value_pallas(spec, x2d, pbuf), (x2d, pbuf)


def _critic_value_bwd(spec, residuals, g):
    x2d, pbuf = residuals
    _, vjp = jax.vjp(lambda xx, pp: _critic_value_ref(spec, xx, pp), x2d, pbuf)
    return vjp(g)


_critic_value.defvjp(_critic_value_fwd, _critic_value_bwd)


def critic_forward(h_features, params):
    """Pallas forward of Critic: returns (stop_gradient(value), value).

    h_features: (B, S, D) or unbatched (S, D).
    params = (W1, b1, W2, b2, w3, b3) with W1 (D,H1), b1 (H1,), W2 (H1,H2),
             b2 (H2,), w3 (H2,), b3 ().
    """
    x = jnp.asarray(h_features)
    unbatched = x.ndim == 2
    if unbatched:
        x = x[None]
    B, S, D = x.shape
    H1 = params[0].shape[1]
    H2 = params[2].shape[1]
    assert params[0].shape[0] == D

    if S * D <= _FLATTEN_MAX_K:
        # Fold the mean-pool into the first matmul: lane-dense (B, S*D) rows
        # against an (S*D, H1) stack of W1/S (reshape is free, row-major).
        x2d = jnp.reshape(x, (B, S * D))
        tile, scale = S, 1.0 / float(S)
    else:
        # TODO(synk): for very large S*D, tile S as an in-kernel reduction axis
        # instead of this XLA-side pre-pool.
        x2d = jnp.mean(x.astype(jnp.float32), axis=1).astype(x.dtype)
        tile, scale = 1, 1.0
    K = tile * D

    layout = _make_layout(K, H1, H2)
    C, R = layout[3], layout[8]
    pbuf = _pack_params(params, tile, scale, layout, x.dtype)

    itemsize = jnp.dtype(x.dtype).itemsize
    TB, B_pad = _choose_tiling(B, K, itemsize, R * C * itemsize)
    if B_pad != B:
        x2d = jnp.pad(x2d, ((0, B_pad - B), (0, 0)))     # zero rows are inert
    spec = layout + (TB,)

    v = _critic_value(spec, x2d, pbuf)[:B]               # (B,)
    if unbatched:
        v = v[0]                                         # matches torch .squeeze()
    return jax.lax.stop_gradient(v), v                   # (.detach(), value)


def init_params(key, input_dim, hidden_dim1, hidden_dim2):
    """Deterministic synthetic parameters for the value_head MLP (stored [in, out])."""
    ks = jax.random.split(key, 6)
    s = 0.1
    w1 = s * jax.random.normal(ks[0], (input_dim, hidden_dim1), jnp.float32)
    b1 = s * jax.random.normal(ks[1], (hidden_dim1,), jnp.float32)
    w2 = s * jax.random.normal(ks[2], (hidden_dim1, hidden_dim2), jnp.float32)
    b2 = s * jax.random.normal(ks[3], (hidden_dim2,), jnp.float32)
    w3 = s * jax.random.normal(ks[4], (hidden_dim2,), jnp.float32)
    b3 = s * jax.random.normal(ks[5], (), jnp.float32)
    return (w1, b1, w2, b2, w3, b3)


if __name__ == "__main__":
    # Shapes consistent with the module: batch=2, seq=8, input_dim=32,
    # hidden_dim1=64, hidden_dim2=32.
    B, S, D, H1, H2 = 2, 8, 32, 64, 32

    key = jax.random.PRNGKey(0)
    k_x, k_p = jax.random.split(key)
    h_features = jax.random.normal(k_x, (B, S, D), jnp.float32)
    params = init_params(k_p, D, H1, H2)

    detached, value = critic_forward(h_features, params)
    jax.block_until_ready((detached, value))

    # Pure-JAX reference of the PyTorch forward pass.
    w1, b1, w2, b2, w3, b3 = params
    pooled = jnp.mean(h_features, axis=-2)
    ref = jnp.maximum(pooled @ w1 + b1, 0.0)
    ref = jnp.maximum(ref @ w2 + b2, 0.0)
    ref = ref @ w3 + b3                                        # (B,)

    assert value.shape == (B,)
    assert detached.shape == (B,)
    assert jnp.allclose(value, ref, atol=1e-4, rtol=1e-4)
    assert jnp.allclose(detached, value)

    # Gradient parity: the non-detached output must carry gradients (custom VJP).
    def loss_kernel(x):
        return jnp.sum(critic_forward(x, params)[1])

    def loss_ref(x):
        p = jnp.mean(x, axis=-2)
        h = jnp.maximum(p @ w1 + b1, 0.0)
        h = jnp.maximum(h @ w2 + b2, 0.0)
        return jnp.sum(h @ w3 + b3)

    g_kernel = jax.grad(loss_kernel)(h_features)
    g_ref = jax.grad(loss_ref)(h_features)
    jax.block_until_ready((g_kernel, g_ref))
    assert jnp.allclose(g_kernel, g_ref, atol=1e-4, rtol=1e-4)

    print("KERNEL_OK")
</pallas_src>

<mosaic_0001>
module attributes {stable_mosaic.version = 11 : i64} {
  func.func @kernel(%arg0: i32, %arg1: memref<8x256xf32, #tpu.memory_space<vmem>>, %arg2: memref<344x64xf32, #tpu.memory_space<vmem>>, %arg3: memref<1x8xf32, #tpu.memory_space<vmem>>) attributes {dimension_semantics = [#tpu.dimension_semantics<parallel>], iteration_bounds = array<i64: 1>, scalar_prefetch = 0 : i64, scratch_operands = 0 : i64, tpu.core_type = #tpu.core_type<tc>, window_params = [{transform_indices = @transform_0, window_bounds = array<i64: 8, 256>}, {pipeline_mode = #tpu.pipeline_mode<synchronous>, transform_indices = @transform_1, window_bounds = array<i64: 344, 64>}, {transform_indices = @transform_2, window_bounds = array<i64: 1, 8>}]} {
    %c0 = arith.constant 0 : index
    %c0_0 = arith.constant 0 : index
    %0 = vector.load %arg1[%c0, %c0_0] : memref<8x256xf32, #tpu.memory_space<vmem>>, vector<8x256xf32>
    %c0_1 = arith.constant 0 : index
    %c0_2 = arith.constant 0 : index
    %1 = vector.load %arg2[%c0_1, %c0_2] : memref<344x64xf32, #tpu.memory_space<vmem>>, vector<256x64xf32>
    %cst = arith.constant dense<0.000000e+00> : vector<8x64xf32>
    %2 = tpu.matmul %0, %1, %cst {dimension_numbers = #tpu.dot_dimension_numbers<[1], [0], [0], [1], [0, 0, 1, 1], [], []>} : vector<8x256xf32>, vector<256x64xf32>, vector<8x64xf32> -> vector<8x64xf32>
    %c256 = arith.constant 256 : index
    %c0_3 = arith.constant 0 : index
    %3 = vector.load %arg2[%c256, %c0_3] : memref<344x64xf32, #tpu.memory_space<vmem>>, vector<1x64xf32>
    %4 = vector.broadcast %3 : vector<1x64xf32> to vector<8x64xf32>
    %5 = arith.addf %2, %4 : vector<8x64xf32>
    %cst_4 = arith.constant 0.000000e+00 : f32
    %6 = vector.broadcast %cst_4 : f32 to vector<8x64xf32>
    %7 = arith.maximumf %5, %6 : vector<8x64xf32>
    %c264 = arith.constant 264 : index
    %c0_5 = arith.constant 0 : index
    %8 = vector.load %arg2[%c264, %c0_5] : memref<344x64xf32, #tpu.memory_space<vmem>>, vector<64x64xf32>
    %cst_6 = arith.constant dense<0.000000e+00> : vector<8x64xf32>
    %9 = tpu.matmul %7, %8, %cst_6 {dimension_numbers = #tpu.dot_dimension_numbers<[1], [0], [0], [1], [0, 0, 1, 1], [], []>} : vector<8x64xf32>, vector<64x64xf32>, vector<8x64xf32> -> vector<8x64xf32>
    %c328 = arith.constant 328 : index
    %c0_7 = arith.constant 0 : index
    %10 = vector.load %arg2[%c328, %c0_7] : memref<344x64xf32, #tpu.memory_space<vmem>>, vector<1x64xf32>
    %11 = vector.broadcast %10 : vector<1x64xf32> to vector<8x64xf32>
    %12 = arith.addf %9, %11 : vector<8x64xf32>
    %cst_8 = arith.constant 0.000000e+00 : f32
    %13 = vector.broadcast %cst_8 : f32 to vector<8x64xf32>
    %14 = arith.maximumf %12, %13 : vector<8x64xf32>
    %c336 = arith.constant 336 : index
    %c0_9 = arith.constant 0 : index
    %15 = vector.load %arg2[%c336, %c0_9] : memref<344x64xf32, #tpu.memory_space<vmem>>, vector<8x64xf32>
    %cst_10 = arith.constant dense<0.000000e+00> : vector<8x8xf32>
    %16 = tpu.matmul %15, %14, %cst_10 {dimension_numbers = #tpu.dot_dimension_numbers<[1], [1], [0], [0], [0, 0, 1, 0], [], []>} : vector<8x64xf32>, vector<8x64xf32>, vector<8x8xf32> -> vector<8x8xf32>
    %17 = vector.extract_strided_slice %16 {offsets = [0, 0], sizes = [1, 8], strides = [1, 1]} : vector<8x8xf32> to vector<1x8xf32>
    %c337 = arith.constant 337 : index
    %c0_11 = arith.constant 0 : index
    %18 = vector.load %arg2[%c337, %c0_11] : memref<344x64xf32, #tpu.memory_space<vmem>>, vector<1x1xf32>
    %19 = vector.broadcast %18 : vector<1x1xf32> to vector<1x8xf32>
    %20 = arith.addf %17, %19 : vector<1x8xf32>
    %c0_12 = arith.constant 0 : index
    %c0_13 = arith.constant 0 : index
    %21 = vector.load %arg3[%c0_12, %c0_13] : memref<1x8xf32, #tpu.memory_space<vmem>>, vector<1x8xf32>
    tpu.vector_store %arg3[%c0_12, %c0_13], %20 {strides = array<i32>} : memref<1x8xf32, #tpu.memory_space<vmem>>, vector<1x8xf32>,
    return
  }
  func.func @transform_0(%arg0: i32) -> (i32, i32) {
    %c0_i32 = arith.constant 0 : i32
    %c0_i32_0 = arith.constant 0 : i32
    return %arg0, %c0_i32 : i32, i32
  }
  func.func @transform_1(%arg0: i32) -> (i32, i32) {
    %c0_i32 = arith.constant 0 : i32
    %c0_i32_0 = arith.constant 0 : i32
    %c0_i32_1 = arith.constant 0 : i32
    return %c0_i32, %c0_i32_0 : i32, i32
  }
  func.func @transform_2(%arg0: i32) -> (i32, i32) {
    %c0_i32 = arith.constant 0 : i32
    %c0_i32_0 = arith.constant 0 : i32
    return %c0_i32, %arg0 : i32, i32
  }
}

</mosaic_0001>

<llo_original>
// kernel: tpu_custom_call.1
$region0: #{tpu_custom_call.1}
  #allocation0 [shape = 'u32[]', space=smem, size = 0x4, offset = 0x4, fixed_abs, tag = 'smem constant byte address 0x4 - core index']
  #allocation1 [shape = 'u32[144,128]{1,0:T(1,128)}', space=vmem, size = 0x12000, scoped, tag = 'internal scratch']
  %s0 = inlined_call_operand.vmem [shape: f32[8,256], index: 0, kind: input, shape index: {}]
  %s1 = inlined_call_operand.vmem [shape: f32[344,64], index: 1, kind: input, shape index: {}]
  %s2 = inlined_call_operand.hbm [shape: f32[1,8], index: 2, kind: output, shape index: {}]
  %s3 = sld [smem:[#allocation0]]
  $region18: #{tpu_custom_call.1} parent=0
    _
  %s5 = ssub.s32 1, %s3
  %s6 = scalar_select 0, %s5, %s3
  $region1: #{tpu_custom_call.1} parent=0
    #allocation2 [shape = 'u8[512]{0}', space=vmem, size = 0x400, scoped, tag = 'output window, operand 0, single buffered']
    #allocation3 [shape = 's32[1]{0}', space=sflag, size = 0x4, scoped, tag = 'scoped memory for tpu_custom_call.1']
    %7 = vsyncpa [#allocation3], 0
    // Predicated region
    $region2: #{tpu_custom_call.1} parent=1 // pred_check
      _
    $region3: #{tpu_custom_call.1} parent=1 // pred_check_branch
      %9 = sbr.rel (0) target = $region5
    $region4: #{tpu_custom_call.1} parent=1 // pred_region
      _
    $region5: #{tpu_custom_call.1} parent=1 // pred_fallthru
      _
    // Predicated region
    $region6: #{tpu_custom_call.1} parent=1 // pred_check
      _
    $region7: #{tpu_custom_call.1} parent=1 // pred_check_branch
      %11 = sbr.rel (0) target = $region9
    $region8: #{tpu_custom_call.1} parent=1 // pred_region
      _
    $region9: #{tpu_custom_call.1} parent=1 // pred_fallthru
      _
    %v12 = vld [vmem:[%s0] sm:$0xff]
    %v13 = vld [vmem:[%s0 + $0x8] sm:$0xff]
    %v14 = vld [vmem:[%s1] sm:$0xff]
    %v15 = vld [vmem:[%s1 + $0x8] sm:$0xff]
    %v16 = vld [vmem:[%s1 + $0x10] sm:$0xff]
    %v17 = vld [vmem:[%s1 + $0x18] sm:$0xff]
    %v18 = vld [vmem:[%s1 + $0x20] sm:$0xff]
    %v19 = vld [vmem:[%s1 + $0x28] sm:$0xff]
    %v20 = vld [vmem:[%s1 + $0x30] sm:$0xff]
    %v21 = vld [vmem:[%s1 + $0x38] sm:$0xff]
    %v22 = vld [vmem:[%s1 + $0x40] sm:$0xff]
    %v23 = vld [vmem:[%s1 + $0x48] sm:$0xff]
    %v24 = vld [vmem:[%s1 + $0x50] sm:$0xff]
    %v25 = vld [vmem:[%s1 + $0x58] sm:$0xff]
    %v26 = vld [vmem:[%s1 + $0x60] sm:$0xff]
    %v27 = vld [vmem:[%s1 + $0x68] sm:$0xff]
    %v28 = vld [vmem:[%s1 + $0x70] sm:$0xff]
    %v29 = vld [vmem:[%s1 + $0x78] sm:$0xff]
    %v30 = vld [vmem:[%s1 + $0x80] sm:$0xff]
    %v31 = vld [vmem:[%s1 + $0x88] sm:$0xff]
    %v32 = vld [vmem:[%s1 + $0x90] sm:$0xff]
    %v33 = vld [vmem:[%s1 + $0x98] sm:$0xff]
    %v34 = vld [vmem:[%s1 + $0xa0] sm:$0xff]
    %v35 = vld [vmem:[%s1 + $0xa8] sm:$0xff]
    %v36 = vld [vmem:[%s1 + $0xb0] sm:$0xff]
    %v37 = vld [vmem:[%s1 + $0xb8] sm:$0xff]
    %v38 = vld [vmem:[%s1 + $0xc0] sm:$0xff]
    %v39 = vld [vmem:[%s1 + $0xc8] sm:$0xff]
    %v40 = vld [vmem:[%s1 + $0xd0] sm:$0xff]
    %v41 = vld [vmem:[%s1 + $0xd8] sm:$0xff]
    %v42 = vld [vmem:[%s1 + $0xe0] sm:$0xff]
    %v43 = vld [vmem:[%s1 + $0xe8] sm:$0xff]
    %v44 = vld [vmem:[%s1 + $0xf0] sm:$0xff]
    %v45 = vld [vmem:[%s1 + $0xf8] sm:$0xff]
    %v46 = vld [vmem:[%s1 + $0x100] sm:$0x1]
    %v47 = vlaneseq
    %v48 = vshrl.u32 %v47, 7
    %v49 = vsub.s32 0, %v48
    %v50 = vrot.slane %v46, %v49
    %51 = vmatprep.subr.mxu0 0.0
    %52 = vmatpush1.msra.mxu0 %v29
    %53 = vmatprep.subr.mxu0 0.0
    %54 = vmatpush1.msra.mxu0 %v28
    %55 = vmatprep.subr.mxu0 0.0
    %56 = vmatpush1.msra.mxu0 %v27
    %57 = vmatprep.subr.mxu0 0.0
    %58 = vmatpush1.msra.mxu0 %v26
    %59 = vmatprep.subr.mxu0 0.0
    %60 = vmatpush1.msra.mxu0 %v25
    %61 = vmatprep.subr.mxu0 0.0
    %62 = vmatpush1.msra.mxu0 %v24
    %63 = vmatprep.subr.mxu0 0.0
    %64 = vmatpush1.msra.mxu0 %v23
    %65 = vmatprep.subr.mxu0 0.0
    %66 = vmatpush1.msra.mxu0 %v22
    %67 = vmatprep.subr.mxu0 0.0
    %68 = vmatpush1.msra.mxu0 %v21
    %69 = vmatprep.subr.mxu0 0.0
    %70 = vmatpush1.msra.mxu0 %v20
    %71 = vmatprep.subr.mxu0 0.0
    %72 = vmatpush1.msra.mxu0 %v19
    %73 = vmatprep.subr.mxu0 0.0
    %74 = vmatpush1.msra.mxu0 %v18
    %75 = vmatprep.subr.mxu0 0.0
    %76 = vmatpush1.msra.mxu0 %v17
    %77 = vmatprep.subr.mxu0 0.0
    %78 = vmatpush1.msra.mxu0 %v16
    %79 = vmatprep.subr.mxu0 0.0
    %80 = vmatpush1.msra.mxu0 %v15
    %81 = vmatprep.subr.mxu0 0.0
    %82 = vmatpush1.msra.mxu0 %v14
    %83 = vmatprep.subr.mxu0 0.0
    %84 = vmatpush2.msra.mxu0 %v45
    %85 = vmatprep.subr.mxu0 0.0
    %86 = vmatpush2.msra.mxu0 %v44
    %87 = vmatprep.subr.mxu0 0.0
    %88 = vmatpush2.msra.mxu0 %v43
    %89 = vmatprep.subr.mxu0 0.0
    %90 = vmatpush2.msra.mxu0 %v42
    %91 = vmatprep.subr.mxu0 0.0
    %92 = vmatpush2.msra.mxu0 %v41
    %93 = vmatprep.subr.mxu0 0.0
    %94 = vmatpush2.msra.mxu0 %v40
    %95 = vmatprep.subr.mxu0 0.0
    %96 = vmatpush2.msra.mxu0 %v39
    %97 = vmatprep.subr.mxu0 0.0
    %98 = vmatpush2.msra.mxu0 %v38
    %99 = vmatprep.subr.mxu0 0.0
    %100 = vmatpush2.msra.mxu0 %v37
    %101 = vmatprep.subr.mxu0 0.0
    %102 = vmatpush2.msra.mxu0 %v36
    %103 = vmatprep.subr.mxu0 0.0
    %104 = vmatpush2.msra.mxu0 %v35
    %105 = vmatprep.subr.mxu0 0.0
    %106 = vmatpush2.msra.mxu0 %v34
    %107 = vmatprep.subr.mxu0 0.0
    %108 = vmatpush2.msra.mxu0 %v33
    %109 = vmatprep.subr.mxu0 0.0
    %110 = vmatpush2.msra.mxu0 %v32
    %111 = vmatprep.subr.mxu0 0.0
    %112 = vmatpush2.msra.mxu0 %v31
    %113 = vmatprep.subr.mxu0 0.0
    %114 = vmatpush2.msra.mxu0 %v30
    %115 = vmatprep.mubr.f32.mxu0 %v13
    %116 = vmatmul.mubr.f32.gmra.mxu0 %v12
    %v117 = vpop.f32.mrf.mxu0
    %v118 = vadd.f32 %v50, %v117
    %v119 = vpop.f32.mrf.mxu0
    %120 = vdwg.mxu0
    %v121 = vmax.f32 %v118, 0.0
    %v122 = vld [vmem:[%s1 + $0x108] sm:$0xff]
    %v123 = vld [vmem:[%s1 + $0x110] sm:$0xff]
    %v124 = vld [vmem:[%s1 + $0x118] sm:$0xff]
    %v125 = vld [vmem:[%s1 + $0x120] sm:$0xff]
    %v126 = vld [vmem:[%s1 + $0x128] sm:$0xff]
    %v127 = vld [vmem:[%s1 + $0x130] sm:$0xff]
    %v128 = vld [vmem:[%s1 + $0x138] sm:$0xff]
    %v129 = vld [vmem:[%s1 + $0x140] sm:$0xff]
    %v130 = vld [vmem:[%s1 + $0x148] sm:$0x1]
    %v131 = vlaneseq
    %v132 = vshrl.u32 %v131, 7
    %v133 = vsub.s32 0, %v132
    %v134 = vrot.slane %v130, %v133
    %vm135 = vcmask 523264
    %v137 = vsel %vm135, %v121, 0
    %139 = vmatprep.subr.mxu0 0.0
    %140 = vmatpush1.msra.mxu0 0.0
    %141 = vmatprep.subr.mxu0 0.0
    %142 = vmatpush1.msra.mxu0 0.0
    %143 = vmatprep.subr.mxu0 0.0
    %144 = vmatpush1.msra.mxu0 0.0
    %145 = vmatprep.subr.mxu0 0.0
    %146 = vmatpush1.msra.mxu0 0.0
    %147 = vmatprep.subr.mxu0 0.0
    %148 = vmatpush1.msra.mxu0 0.0
    %149 = vmatprep.subr.mxu0 0.0
    %150 = vmatpush1.msra.mxu0 0.0
    %151 = vmatprep.subr.mxu0 0.0
    %152 = vmatpush1.msra.mxu0 0.0
    %153 = vmatprep.subr.mxu0 0.0
    %154 = vmatpush1.msra.mxu0 0.0
    %155 = vmatprep.subr.mxu0 0.0
    %156 = vmatpush1.msra.mxu0 %v129
    %157 = vmatprep.subr.mxu0 0.0
    %158 = vmatpush1.msra.mxu0 %v128
    %159 = vmatprep.subr.mxu0 0.0
    %160 = vmatpush1.msra.mxu0 %v127
    %161 = vmatprep.subr.mxu0 0.0
    %162 = vmatpush1.msra.mxu0 %v126
    %163 = vmatprep.subr.mxu0 0.0
    %164 = vmatpush1.msra.mxu0 %v125
    %165 = vmatprep.subr.mxu0 0.0
    %166 = vmatpush1.msra.mxu0 %v124
    %167 = vmatprep.subr.mxu0 0.0
    %168 = vmatpush1.msra.mxu0 %v123
    %169 = vmatprep.subr.mxu0 0.0
    %170 = vmatpush1.msra.mxu0 %v122
    %171 = vmatprep.subr.mxu0 0.0
    %172 = vmatpush2.msra.mxu0 0.0
    %173 = vmatprep.subr.mxu0 0.0
    %174 = vmatpush2.msra.mxu0 0.0
    %175 = vmatprep.subr.mxu0 0.0
    %176 = vmatpush2.msra.mxu0 0.0
    %177 = vmatprep.subr.mxu0 0.0
    %178 = vmatpush2.msra.mxu0 0.0
    %179 = vmatprep.subr.mxu0 0.0
    %180 = vmatpush2.msra.mxu0 0.0
    %181 = vmatprep.subr.mxu0 0.0
    %182 = vmatpush2.msra.mxu0 0.0
    %183 = vmatprep.subr.mxu0 0.0
    %184 = vmatpush2.msra.mxu0 0.0
    %185 = vmatprep.subr.mxu0 0.0
    %186 = vmatpush2.msra.mxu0 0.0
    %187 = vmatprep.subr.mxu0 0.0
    %188 = vmatpush2.msra.mxu0 0.0
    %189 = vmatprep.subr.mxu0 0.0
    %190 = vmatpush2.msra.mxu0 0.0
    %191 = vmatprep.subr.mxu0 0.0
    %192 = vmatpush2.msra.mxu0 0.0
    %193 = vmatprep.subr.mxu0 0.0
    %194 = vmatpush2.msra.mxu0 0.0
    %195 = vmatprep.subr.mxu0 0.0
    %196 = vmatpush2.msra.mxu0 0.0
    %197 = vmatprep.subr.mxu0 0.0
    %198 = vmatpush2.msra.mxu0 0.0
    %199 = vmatprep.subr.mxu0 0.0
    %200 = vmatpush2.msra.mxu0 0.0
    %201 = vmatprep.subr.mxu0 0.0
    %202 = vmatpush2.msra.mxu0 0.0
    %203 = vmatprep.mubr.f32.mxu0 0.0
    %204 = vmatmul.mubr.f32.gmra.mxu0 %v137
    %v205 = vpop.f32.mrf.mxu0
    %v206 = vadd.f32 %v134, %v205
    %v207 = vpop.f32.mrf.mxu0
    %208 = vdwg.mxu0
    %v209 = vmax.f32 %v206, 0.0
    %v210 = vld [vmem:[%s1 + $0x150] sm:$0xff]
    %v212 = vsel %vm135, %v210, 0
    %v215 = vsel %vm135, %v209, 0
    %217 = vmatprep.subr.mxu0 0.0
    %218 = vmatpush1.xpose.msra.mxu0 0.0
    %219 = vmatprep.subr.mxu0 0.0
    %220 = vmatpush1.xpose.msra.mxu0 0.0
    %221 = vmatprep.subr.mxu0 0.0
    %222 = vmatpush1.xpose.msra.mxu0 0.0
    %223 = vmatprep.subr.mxu0 0.0
    %224 = vmatpush1.xpose.msra.mxu0 0.0
    %225 = vmatprep.subr.mxu0 0.0
    %226 = vmatpush1.xpose.msra.mxu0 0.0
    %227 = vmatprep.subr.mxu0 0.0
    %228 = vmatpush1.xpose.msra.mxu0 0.0
    %229 = vmatprep.subr.mxu0 0.0
    %230 = vmatpush1.xpose.msra.mxu0 0.0
    %231 = vmatprep.subr.mxu0 0.0
    %232 = vmatpush1.xpose.msra.mxu0 0.0
    %233 = vmatprep.subr.mxu0 0.0
    %234 = vmatpush1.xpose.msra.mxu0 0.0
    %235 = vmatprep.subr.mxu0 0.0
    %236 = vmatpush1.xpose.msra.mxu0 0.0
    %237 = vmatprep.subr.mxu0 0.0
    %238 = vmatpush1.xpose.msra.mxu0 0.0
    %239 = vmatprep.subr.mxu0 0.0
    %240 = vmatpush1.xpose.msra.mxu0 0.0
    %241 = vmatprep.subr.mxu0 0.0
    %242 = vmatpush1.xpose.msra.mxu0 0.0
    %243 = vmatprep.subr.mxu0 0.0
    %244 = vmatpush1.xpose.msra.mxu0 0.0
    %245 = vmatprep.subr.mxu0 0.0
    %246 = vmatpush1.xpose.msra.mxu0 0.0
    %247 = vmatprep.subr.mxu0 0.0
    %248 = vmatpush1.xpose.msra.mxu0 %v215
    %249 = vmatprep.subr.mxu0 0.0
    %250 = vmatpush2.xpose.msra.mxu0 0.0
    %251 = vmatprep.subr.mxu0 0.0
    %252 = vmatpush2.xpose.msra.mxu0 0.0
    %253 = vmatprep.subr.mxu0 0.0
    %254 = vmatpush2.xpose.msra.mxu0 0.0
    %255 = vmatprep.subr.mxu0 0.0
    %256 = vmatpush2.xpose.msra.mxu0 0.0
    %257 = vmatprep.subr.mxu0 0.0
    %258 = vmatpush2.xpose.msra.mxu0 0.0
    %259 = vmatprep.subr.mxu0 0.0
    %260 = vmatpush2.xpose.msra.mxu0 0.0
    %261 = vmatprep.subr.mxu0 0.0
    %262 = vmatpush2.xpose.msra.mxu0 0.0
    %263 = vmatprep.subr.mxu0 0.0
    %264 = vmatpush2.xpose.msra.mxu0 0.0
    %265 = vmatprep.subr.mxu0 0.0
    %266 = vmatpush2.xpose.msra.mxu0 0.0
    %267 = vmatprep.subr.mxu0 0.0
    %268 = vmatpush2.xpose.msra.mxu0 0.0
    %269 = vmatprep.subr.mxu0 0.0
    %270 = vmatpush2.xpose.msra.mxu0 0.0
    %271 = vmatprep.subr.mxu0 0.0
    %272 = vmatpush2.xpose.msra.mxu0 0.0
    %273 = vmatprep.subr.mxu0 0.0
    %274 = vmatpush2.xpose.msra.mxu0 0.0
    %275 = vmatprep.subr.mxu0 0.0
    %276 = vmatpush2.xpose.msra.mxu0 0.0
    %277 = vmatprep.subr.mxu0 0.0
    %278 = vmatpush2.xpose.msra.mxu0 0.0
    %279 = vmatprep.subr.mxu0 0.0
    %280 = vmatpush2.xpose.msra.mxu0 0.0
    %281 = vmatprep.mubr.f32.mxu0 0.0
    %282 = vmatmul.mubr.f32.gmra.mxu0 %v212
    %v283 = vpop.f32.mrf.mxu0
    %v284 = vadd.f32 0.0, %v283
    %v285 = vpop.f32.mrf.mxu0
    %286 = vdwg.mxu0
    %v287 = vld [vmem:[%s1 + $0x151] sm:$0x1]
    %289 = vset.pattern.permute.xlu0 0
    %290 = vperm.xlu0 %289, %v287
    %v291 = vpop.permute.xlu0 %290
    %v293 = vadd.f32 %v284, %v291
    %vm294 = vcmask 57344
    %295 = vst.msk [vmem:[#allocation2] sm:$0x1] %vm294, %v293
    // Predicated region
    $region10: #{tpu_custom_call.1} parent=1 // pred_check
      _
    $region11: #{tpu_custom_call.1} parent=1 // pred_check_branch
      %297 = sbr.rel (0) target = $region13
    $region12: #{tpu_custom_call.1} parent=1 // pred_region
      %s299 = ssub.s32 16, 16
      %300 = vsyncadd [#allocation3], %s299
      %s302 = sshll.u32 [#allocation2], 4
      %s303 = int_to_ptr.vmem [resolvable:$true] %s302
      %305 = dma.vmem_to_hbm [thread:$0]  %s303, 16, %s2, [#allocation3]
    $region13: #{tpu_custom_call.1} parent=1 // pred_fallthru
      _
    // Predicated region
    $region14: #{tpu_custom_call.1} parent=1 // pred_check
      _
    $region15: #{tpu_custom_call.1} parent=1 // pred_check_branch
      %307 = sbr.rel (0) target = $region17
    $region16: #{tpu_custom_call.1} parent=1 // pred_region
      %308 = dma.done [#allocation3], 16
    $region17: #{tpu_custom_call.1} parent=1 // pred_fallthru
      _
    %309 = vsyncpa [#allocation3], 1

</llo_original>
